<compile_context>
chip_gen: v7x
topology: tpu7x:2x2x1
jax: 0.10.0
libtpu: 0.0.40
codegen_flags: <defaults>
</compile_context>

<pallas_src>
import functools
import math

import jax
import jax.numpy as jnp
from jax.experimental import pallas as pl
from jax.experimental.pallas import tpu as pltpu


def _round_up(n, m):
    return ((n + m - 1) // m) * m


def dqn_kernel(x_ref, w1_ref, b1_ref, w2_ref, b2_ref, o_ref):
    # hidden = relu(x @ W1 + b1)
    h = jnp.dot(x_ref[...], w1_ref[...], preferred_element_type=jnp.float32)
    h = jnp.maximum(h + b1_ref[...], 0.0)          # bias + ReLU on the VPU
    # out = hidden @ W2 + b2  -- keep the f32 accumulator between layers
    out = jnp.dot(h, w2_ref[...], preferred_element_type=jnp.float32)
    out = out + b2_ref[...]
    o_ref[...] = out.astype(o_ref.dtype)           # lane-dense (128-padded) store


@functools.partial(jax.jit, static_argnames=("block_batch",))
def dqn_forward(x, w1, b1, w2, b2, *, block_batch=256):
    """x: [B, input]; w1: [input, hidden]; b1: [1, hidden];
       w2: [hidden, output]; b2: [1, output] -> [B, output]."""
    B, in_dim = x.shape
    hidden = w1.shape[1]
    out_dim = w2.shape[1]
    dtype = x.dtype

    # --- lane-dense output: pad the tiny output width up to a 128-lane vreg ---
    out_pad = _round_up(out_dim, 128)
    if out_pad != out_dim:
        w2p = jnp.pad(w2, ((0, 0), (0, out_pad - out_dim)))
        b2p = jnp.pad(b2, ((0, 0), (0, out_pad - out_dim)))
    else:
        w2p, b2p = w2, b2

    # --- tile the batch axis; sublane-aligned tile, amortize launch cost ---
    tb = min(block_batch, _round_up(B, 8))
    b_pad = _round_up(B, tb)
    xp = jnp.pad(x, ((0, b_pad - B), (0, 0))) if b_pad != B else x
    grid = (b_pad // tb,)

    flops = 2 * b_pad * (in_dim * hidden + hidden * out_pad)
    bytes_accessed = (
        xp.size + w1.size + b1.size + w2p.size + b2p.size + b_pad * out_pad
    ) * jnp.dtype(dtype).itemsize

    out = pl.pallas_call(
        dqn_kernel,
        out_shape=jax.ShapeDtypeStruct((b_pad, out_pad), dtype),
        grid=grid,
        in_specs=[
            pl.BlockSpec((tb, in_dim), lambda i: (i, 0)),       # stream batch tiles
            pl.BlockSpec((in_dim, hidden), lambda i: (0, 0)),   # W1 resident
            pl.BlockSpec((1, hidden), lambda i: (0, 0)),        # b1 resident
            pl.BlockSpec((hidden, out_pad), lambda i: (0, 0)),  # W2 (padded) resident
            pl.BlockSpec((1, out_pad), lambda i: (0, 0)),       # b2 (padded) resident
        ],
        out_specs=pl.BlockSpec((tb, out_pad), lambda i: (i, 0)),
        compiler_params=pltpu.CompilerParams(
            dimension_semantics=("parallel",),  # megacore sharding on v7x; harmless elsewhere
        ),
        cost_estimate=pl.CostEstimate(
            flops=flops, transcendentals=0, bytes_accessed=bytes_accessed),
    )(xp, w1, b1, w2p, b2p)

    return out[:B, :out_dim]


def init_linear(key, fan_in, fan_out, dtype=jnp.float32):
    """PyTorch-style nn.Linear init: U(-1/sqrt(fan_in), 1/sqrt(fan_in)).
    Weight returned as [fan_in, fan_out] (already transposed for x @ W), bias [1, fan_out]."""
    kw, kb = jax.random.split(key)
    bound = 1.0 / math.sqrt(fan_in)
    w = jax.random.uniform(kw, (fan_in, fan_out), dtype, minval=-bound, maxval=bound)
    b = jax.random.uniform(kb, (1, fan_out), dtype, minval=-bound, maxval=bound)
    return w, b


if __name__ == "__main__":
    # DQN(input=32, hidden=32, output=4), batch=8
    IN_DIM, HIDDEN, OUT_DIM, BATCH = 32, 32, 4, 8

    root = jax.random.PRNGKey(0)
    kx, k1, k2 = jax.random.split(root, 3)

    x = jax.random.normal(kx, (BATCH, IN_DIM), jnp.float32)
    w1, b1 = init_linear(k1, IN_DIM, HIDDEN)
    w2, b2 = init_linear(k2, HIDDEN, OUT_DIM)

    out = dqn_forward(x, w1, b1, w2, b2)
    out = jax.block_until_ready(out)

    # Reference check (plain JAX) to validate forward semantics.
    ref = jnp.maximum(x @ w1 + b1, 0.0) @ w2 + b2
    assert out.shape == (BATCH, OUT_DIM)
    assert jnp.allclose(out, ref, atol=1e-5, rtol=1e-5)

    # Also exercise the batch-padding / multi-tile path (B not a multiple of 8).
    x2 = jax.random.normal(jax.random.PRNGKey(1), (6, IN_DIM), jnp.float32)
    out2 = jax.block_until_ready(dqn_forward(x2, w1, b1, w2, b2))
    ref2 = jnp.maximum(x2 @ w1 + b1, 0.0) @ w2 + b2
    assert out2.shape == (6, OUT_DIM)
    assert jnp.allclose(out2, ref2, atol=1e-5, rtol=1e-5)

    # Larger batch to exercise the multi-tile grid path with resident weights.
    x3 = jax.random.normal(jax.random.PRNGKey(2), (600, IN_DIM), jnp.float32)
    out3 = jax.block_until_ready(dqn_forward(x3, w1, b1, w2, b2))
    ref3 = jnp.maximum(x3 @ w1 + b1, 0.0) @ w2 + b2
    assert out3.shape == (600, OUT_DIM)
    assert jnp.allclose(out3, ref3, atol=1e-5, rtol=1e-5)

    print("KERNEL_OK")
</pallas_src>

<mosaic_0001>
module attributes {stable_mosaic.version = 11 : i64} {
  func.func @dqn_kernel(%arg0: i32, %arg1: memref<8x32xf32, #tpu.memory_space<vmem>>, %arg2: memref<32x32xf32, #tpu.memory_space<vmem>>, %arg3: memref<1x32xf32, #tpu.memory_space<vmem>>, %arg4: memref<32x128xf32, #tpu.memory_space<vmem>>, %arg5: memref<1x128xf32, #tpu.memory_space<vmem>>, %arg6: memref<8x128xf32, #tpu.memory_space<vmem>>) attributes {dimension_semantics = [#tpu.dimension_semantics<parallel>], iteration_bounds = array<i64: 1>, scalar_prefetch = 0 : i64, scratch_operands = 0 : i64, tpu.core_type = #tpu.core_type<tc>, window_params = [{transform_indices = @transform_0, window_bounds = array<i64: 8, 32>}, {pipeline_mode = #tpu.pipeline_mode<synchronous>, transform_indices = @transform_1, window_bounds = array<i64: 32, 32>}, {pipeline_mode = #tpu.pipeline_mode<synchronous>, transform_indices = @transform_2, window_bounds = array<i64: 1, 32>}, {pipeline_mode = #tpu.pipeline_mode<synchronous>, transform_indices = @transform_3, window_bounds = array<i64: 32, 128>}, {pipeline_mode = #tpu.pipeline_mode<synchronous>, transform_indices = @transform_4, window_bounds = array<i64: 1, 128>}, {transform_indices = @transform_5, window_bounds = array<i64: 8, 128>}]} {
    %c0 = arith.constant 0 : index
    %c0_0 = arith.constant 0 : index
    %0 = vector.load %arg1[%c0, %c0_0] : memref<8x32xf32, #tpu.memory_space<vmem>>, vector<8x32xf32>
    %c0_1 = arith.constant 0 : index
    %c0_2 = arith.constant 0 : index
    %1 = vector.load %arg2[%c0_1, %c0_2] : memref<32x32xf32, #tpu.memory_space<vmem>>, vector<32x32xf32>
    %cst = arith.constant dense<0.000000e+00> : vector<8x32xf32>
    %2 = tpu.matmul %0, %1, %cst {dimension_numbers = #tpu.dot_dimension_numbers<[1], [0], [0], [1], [0, 0, 1, 1], [], []>} : vector<8x32xf32>, vector<32x32xf32>, vector<8x32xf32> -> vector<8x32xf32>
    %c0_3 = arith.constant 0 : index
    %c0_4 = arith.constant 0 : index
    %3 = vector.load %arg3[%c0_3, %c0_4] : memref<1x32xf32, #tpu.memory_space<vmem>>, vector<1x32xf32>
    %4 = vector.broadcast %3 : vector<1x32xf32> to vector<8x32xf32>
    %5 = arith.addf %2, %4 : vector<8x32xf32>
    %cst_5 = arith.constant 0.000000e+00 : f32
    %6 = vector.broadcast %cst_5 : f32 to vector<8x32xf32>
    %7 = arith.maximumf %5, %6 : vector<8x32xf32>
    %c0_6 = arith.constant 0 : index
    %c0_7 = arith.constant 0 : index
    %8 = vector.load %arg4[%c0_6, %c0_7] : memref<32x128xf32, #tpu.memory_space<vmem>>, vector<32x128xf32>
    %cst_8 = arith.constant dense<0.000000e+00> : vector<8x128xf32>
    %9 = tpu.matmul %7, %8, %cst_8 {dimension_numbers = #tpu.dot_dimension_numbers<[1], [0], [0], [1], [0, 0, 1, 1], [], []>} : vector<8x32xf32>, vector<32x128xf32>, vector<8x128xf32> -> vector<8x128xf32>
    %c0_9 = arith.constant 0 : index
    %c0_10 = arith.constant 0 : index
    %10 = vector.load %arg5[%c0_9, %c0_10] : memref<1x128xf32, #tpu.memory_space<vmem>>, vector<1x128xf32>
    %11 = vector.broadcast %10 : vector<1x128xf32> to vector<8x128xf32>
    %12 = arith.addf %9, %11 : vector<8x128xf32>
    %c0_11 = arith.constant 0 : index
    %c0_12 = arith.constant 0 : index
    %13 = vector.load %arg6[%c0_11, %c0_12] : memref<8x128xf32, #tpu.memory_space<vmem>>, vector<8x128xf32>
    tpu.vector_store %arg6[%c0_11, %c0_12], %12 {strides = array<i32>} : memref<8x128xf32, #tpu.memory_space<vmem>>, vector<8x128xf32>,
    return
  }
  func.func @transform_0(%arg0: i32) -> (i32, i32) {
    %c0_i32 = arith.constant 0 : i32
    %c0_i32_0 = arith.constant 0 : i32
    return %arg0, %c0_i32 : i32, i32
  }
  func.func @transform_1(%arg0: i32) -> (i32, i32) {
    %c0_i32 = arith.constant 0 : i32
    %c0_i32_0 = arith.constant 0 : i32
    %c0_i32_1 = arith.constant 0 : i32
    return %c0_i32, %c0_i32_0 : i32, i32
  }
  func.func @transform_2(%arg0: i32) -> (i32, i32) {
    %c0_i32 = arith.constant 0 : i32
    %c0_i32_0 = arith.constant 0 : i32
    %c0_i32_1 = arith.constant 0 : i32
    return %c0_i32, %c0_i32_0 : i32, i32
  }
  func.func @transform_3(%arg0: i32) -> (i32, i32) {
    %c0_i32 = arith.constant 0 : i32
    %c0_i32_0 = arith.constant 0 : i32
    %c0_i32_1 = arith.constant 0 : i32
    return %c0_i32, %c0_i32_0 : i32, i32
  }
  func.func @transform_4(%arg0: i32) -> (i32, i32) {
    %c0_i32 = arith.constant 0 : i32
    %c0_i32_0 = arith.constant 0 : i32
    %c0_i32_1 = arith.constant 0 : i32
    return %c0_i32, %c0_i32_0 : i32, i32
  }
  func.func @transform_5(%arg0: i32) -> (i32, i32) {
    %c0_i32 = arith.constant 0 : i32
    %c0_i32_0 = arith.constant 0 : i32
    return %arg0, %c0_i32 : i32, i32
  }
}

</mosaic_0001>

<llo_original>
// kernel: dqn_forward.1
$region0: #{dqn_forward.1}
  #allocation0 [shape = 'u32[]', space=smem, size = 0x4, offset = 0x4, fixed_abs, tag = 'smem constant byte address 0x4 - core index']
  #allocation1 [shape = 'u32[144,128]{1,0:T(1,128)}', space=vmem, size = 0x12000, scoped, tag = 'internal scratch']
  %s0 = inlined_call_operand.vmem [shape: f32[8,32], index: 0, kind: input, shape index: {}]
  %s1 = inlined_call_operand.vmem [shape: f32[32,32], index: 1, kind: input, shape index: {}]
  %s2 = inlined_call_operand.vmem [shape: f32[1,32], index: 2, kind: input, shape index: {}]
  %s3 = inlined_call_operand.vmem [shape: f32[32,128], index: 3, kind: input, shape index: {}]
  %s4 = inlined_call_operand.vmem [shape: f32[1,128], index: 4, kind: input, shape index: {}]
  %s5 = inlined_call_operand.vmem [shape: f32[8,128], index: 5, kind: output, shape index: {}]
  %s6 = sld [smem:[#allocation0]]
  $region30: #{dqn_forward.1} parent=0
    _
  %s8 = ssub.s32 1, %s6
  %s9 = scalar_select 0, %s8, %s6
  // Predicated region
  $region2: #{dqn_forward.1} parent=0 // pred_check
    _
  $region3: #{dqn_forward.1} parent=0 // pred_check_branch
    %11 = sbr.rel (0) target = $region5
  $region4: #{dqn_forward.1} parent=0 // pred_region
    _
  $region5: #{dqn_forward.1} parent=0 // pred_fallthru
    _
  // Predicated region
  $region6: #{dqn_forward.1} parent=0 // pred_check
    _
  $region7: #{dqn_forward.1} parent=0 // pred_check_branch
    %13 = sbr.rel (0) target = $region9
  $region8: #{dqn_forward.1} parent=0 // pred_region
    _
  $region9: #{dqn_forward.1} parent=0 // pred_fallthru
    _
  // Predicated region
  $region10: #{dqn_forward.1} parent=0 // pred_check
    _
  $region11: #{dqn_forward.1} parent=0 // pred_check_branch
    %15 = sbr.rel (0) target = $region13
  $region12: #{dqn_forward.1} parent=0 // pred_region
    _
  $region13: #{dqn_forward.1} parent=0 // pred_fallthru
    _
  // Predicated region
  $region14: #{dqn_forward.1} parent=0 // pred_check
    _
  $region15: #{dqn_forward.1} parent=0 // pred_check_branch
    %17 = sbr.rel (0) target = $region17
  $region16: #{dqn_forward.1} parent=0 // pred_region
    _
  $region17: #{dqn_forward.1} parent=0 // pred_fallthru
    _
  // Predicated region
  $region18: #{dqn_forward.1} parent=0 // pred_check
    _
  $region19: #{dqn_forward.1} parent=0 // pred_check_branch
    %19 = sbr.rel (0) target = $region21
  $region20: #{dqn_forward.1} parent=0 // pred_region
    _
  $region21: #{dqn_forward.1} parent=0 // pred_fallthru
    _
  %v20 = vld [vmem:[%s0] sm:$0xff]
  %v21 = vld [vmem:[%s1] sm:$0xff]
  %v22 = vld [vmem:[%s1 + $0x8] sm:$0xff]
  %v23 = vld [vmem:[%s1 + $0x10] sm:$0xff]
  %v24 = vld [vmem:[%s1 + $0x18] sm:$0xff]
  %v25 = vld [vmem:[%s2] sm:$0x1]
  %v27 = vlaneseq
  %v28 = vshrl.u32 %v27, 7
  %v29 = vsub.s32 0, %v28
  %v30 = vrot.slane %v25, %v29
  %vm32 = vcmask 261120
  %v34 = vsel %vm32, %v20, 0
  %36 = vmatprep.subr.mxu0 0.0
  %37 = vmatpush1.msra.mxu0 %v21
  %38 = vmatprep.subr.mxu0 0.0
  %39 = vmatpush1.msra.mxu0 %v22
  %40 = vmatprep.subr.mxu0 0.0
  %41 = vmatpush1.msra.mxu0 %v23
  %42 = vmatprep.subr.mxu0 0.0
  %43 = vmatpush1.msra.mxu0 %v24
  %44 = vmatprep.subr.mxu0 0.0
  %45 = vmatpush1.msra.mxu0 0.0
  %46 = vmatprep.subr.mxu0 0.0
  %47 = vmatpush1.msra.mxu0 0.0
  %48 = vmatprep.subr.mxu0 0.0
  %49 = vmatpush1.msra.mxu0 0.0
  %50 = vmatprep.subr.mxu0 0.0
  %51 = vmatpush1.msra.mxu0 0.0
  %52 = vmatprep.subr.mxu0 0.0
  %53 = vmatpush1.msra.mxu0 0.0
  %54 = vmatprep.subr.mxu0 0.0
  %55 = vmatpush1.msra.mxu0 0.0
  %56 = vmatprep.subr.mxu0 0.0
  %57 = vmatpush1.msra.mxu0 0.0
  %58 = vmatprep.subr.mxu0 0.0
  %59 = vmatpush1.msra.mxu0 0.0
  %60 = vmatprep.subr.mxu0 0.0
  %61 = vmatpush1.msra.mxu0 0.0
  %62 = vmatprep.subr.mxu0 0.0
  %63 = vmatpush1.msra.mxu0 0.0
  %64 = vmatprep.subr.mxu0 0.0
  %65 = vmatpush1.msra.mxu0 0.0
  %66 = vmatprep.subr.mxu0 0.0
  %67 = vmatpush1.msra.mxu0 0.0
  %68 = vmatprep.subr.mxu0 0.0
  %69 = vmatpush1.msra.mxu0 0.0
  %70 = vmatprep.subr.mxu0 0.0
  %71 = vmatpush1.msra.mxu0 0.0
  %72 = vmatprep.subr.mxu0 0.0
  %73 = vmatpush1.msra.mxu0 0.0
  %74 = vmatprep.subr.mxu0 0.0
  %75 = vmatpush1.msra.mxu0 0.0
  %76 = vmatprep.subr.mxu0 0.0
  %77 = vmatpush1.msra.mxu0 0.0
  %78 = vmatprep.subr.mxu0 0.0
  %79 = vmatpush1.msra.mxu0 0.0
  %80 = vmatprep.subr.mxu0 0.0
  %81 = vmatpush1.msra.mxu0 0.0
  %82 = vmatprep.subr.mxu0 0.0
  %83 = vmatpush1.msra.mxu0 0.0
  %84 = vmatprep.subr.mxu0 0.0
  %85 = vmatpush1.msra.mxu0 0.0
  %86 = vmatprep.subr.mxu0 0.0
  %87 = vmatpush1.msra.mxu0 0.0
  %88 = vmatprep.subr.mxu0 0.0
  %89 = vmatpush1.msra.mxu0 0.0
  %90 = vmatprep.subr.mxu0 0.0
  %91 = vmatpush1.msra.mxu0 0.0
  %92 = vmatprep.subr.mxu0 0.0
  %93 = vmatpush1.msra.mxu0 0.0
  %94 = vmatprep.subr.mxu0 0.0
  %95 = vmatpush1.msra.mxu0 0.0
  %96 = vmatprep.subr.mxu0 0.0
  %97 = vmatpush1.msra.mxu0 0.0
  %98 = vmatprep.subr.mxu0 0.0
  %99 = vmatpush1.msra.mxu0 0.0
  %100 = vmatprep.mubr.f32.mxu0 0.0
  %101 = vmatmul.mubr.f32.gmra.mrb[0].mxu0 %v34
  %v102 = vpop.f32.mrb[0].mxu0
  %v103 = vadd.f32 %v30, %v102
  %v104 = vpop.f32.mrb[0].mxu0
  %105 = vdwg.mxu0
  %v106 = vmax.f32 %v103, 0.0
  %v107 = vld [vmem:[%s3] sm:$0xff]
  %v108 = vld [vmem:[%s3 + $0x8] sm:$0xff]
  %v109 = vld [vmem:[%s3 + $0x10] sm:$0xff]
  %v110 = vld [vmem:[%s3 + $0x18] sm:$0xff]
  %v111 = vld [vmem:[%s4] sm:$0x1]
  %v113 = vlaneseq
  %v114 = vshrl.u32 %v113, 7
  %v115 = vsub.s32 0, %v114
  %v116 = vrot.slane %v111, %v115
  %v119 = vsel %vm32, %v106, 0
  %121 = vmatprep.subr.mxu0 0.0
  %122 = vmatpush1.msra.mxu0 %v107
  %123 = vmatprep.subr.mxu0 0.0
  %124 = vmatpush1.msra.mxu0 %v108
  %125 = vmatprep.subr.mxu0 0.0
  %126 = vmatpush1.msra.mxu0 %v109
  %127 = vmatprep.subr.mxu0 0.0
  %128 = vmatpush1.msra.mxu0 %v110
  %129 = vmatprep.subr.mxu0 0.0
  %130 = vmatpush1.msra.mxu0 0.0
  %131 = vmatprep.subr.mxu0 0.0
  %132 = vmatpush1.msra.mxu0 0.0
  %133 = vmatprep.subr.mxu0 0.0
  %134 = vmatpush1.msra.mxu0 0.0
  %135 = vmatprep.subr.mxu0 0.0
  %136 = vmatpush1.msra.mxu0 0.0
  %137 = vmatprep.subr.mxu0 0.0
  %138 = vmatpush1.msra.mxu0 0.0
  %139 = vmatprep.subr.mxu0 0.0
  %140 = vmatpush1.msra.mxu0 0.0
  %141 = vmatprep.subr.mxu0 0.0
  %142 = vmatpush1.msra.mxu0 0.0
  %143 = vmatprep.subr.mxu0 0.0
  %144 = vmatpush1.msra.mxu0 0.0
  %145 = vmatprep.subr.mxu0 0.0
  %146 = vmatpush1.msra.mxu0 0.0
  %147 = vmatprep.subr.mxu0 0.0
  %148 = vmatpush1.msra.mxu0 0.0
  %149 = vmatprep.subr.mxu0 0.0
  %150 = vmatpush1.msra.mxu0 0.0
  %151 = vmatprep.subr.mxu0 0.0
  %152 = vmatpush1.msra.mxu0 0.0
  %153 = vmatprep.subr.mxu0 0.0
  %154 = vmatpush1.msra.mxu0 0.0
  %155 = vmatprep.subr.mxu0 0.0
  %156 = vmatpush1.msra.mxu0 0.0
  %157 = vmatprep.subr.mxu0 0.0
  %158 = vmatpush1.msra.mxu0 0.0
  %159 = vmatprep.subr.mxu0 0.0
  %160 = vmatpush1.msra.mxu0 0.0
  %161 = vmatprep.subr.mxu0 0.0
  %162 = vmatpush1.msra.mxu0 0.0
  %163 = vmatprep.subr.mxu0 0.0
  %164 = vmatpush1.msra.mxu0 0.0
  %165 = vmatprep.subr.mxu0 0.0
  %166 = vmatpush1.msra.mxu0 0.0
  %167 = vmatprep.subr.mxu0 0.0
  %168 = vmatpush1.msra.mxu0 0.0
  %169 = vmatprep.subr.mxu0 0.0
  %170 = vmatpush1.msra.mxu0 0.0
  %171 = vmatprep.subr.mxu0 0.0
  %172 = vmatpush1.msra.mxu0 0.0
  %173 = vmatprep.subr.mxu0 0.0
  %174 = vmatpush1.msra.mxu0 0.0
  %175 = vmatprep.subr.mxu0 0.0
  %176 = vmatpush1.msra.mxu0 0.0
  %177 = vmatprep.subr.mxu0 0.0
  %178 = vmatpush1.msra.mxu0 0.0
  %179 = vmatprep.subr.mxu0 0.0
  %180 = vmatpush1.msra.mxu0 0.0
  %181 = vmatprep.subr.mxu0 0.0
  %182 = vmatpush1.msra.mxu0 0.0
  %183 = vmatprep.subr.mxu0 0.0
  %184 = vmatpush1.msra.mxu0 0.0
  %185 = vmatprep.mubr.f32.mxu0 0.0
  %186 = vmatmul.mubr.f32.gmra.mrb[0].mxu0 %v119
  %v187 = vpop.f32.mrb[0].mxu0
  %v188 = vadd.f32 %v116, %v187
  %v189 = vpop.f32.mrb[0].mxu0
  %190 = vdwg.mxu0
  %191 = vst [vmem:[%s5] sm:$0xff] %v188
  // Predicated region
  $region22: #{dqn_forward.1} parent=0 // pred_check
    _
  $region23: #{dqn_forward.1} parent=0 // pred_check_branch
    %193 = sbr.rel (0) target = $region25
  $region24: #{dqn_forward.1} parent=0 // pred_region
    _
  $region25: #{dqn_forward.1} parent=0 // pred_fallthru
    _
  // Predicated region
  $region26: #{dqn_forward.1} parent=0 // pred_check
    _
  $region27: #{dqn_forward.1} parent=0 // pred_check_branch
    %195 = sbr.rel (0) target = $region29
  $region28: #{dqn_forward.1} parent=0 // pred_region
    _
  $region29: #{dqn_forward.1} parent=0 // pred_fallthru
    _

</llo_original>
